<compile_context>
chip_gen: v7x
topology: tpu7x:2x2x1
jax: 0.10.0
libtpu: 0.0.40
codegen_flags: <defaults>
</compile_context>

<pallas_src>
import functools

import jax
import jax.numpy as jnp
from jax.experimental import pallas as pl
from jax.experimental.pallas import tpu as pltpu


# ----------------------------------------------------------------------------
# Fused kernel: chain of residual MLP blocks over a layer grid axis.
#   for l in layers:  x = x + gelu_tanh(x @ W1[l] + b1[l]) @ W2[l] + b2[l]
# ----------------------------------------------------------------------------
_GELU_C = 0.7978845608028654  # sqrt(2/pi)


def _fused_mlp_chain_kernel(x_ref, w1_ref, b1_ref, w2_ref, b2_ref, o_ref,
                            acc_ref):
    l = pl.program_id(1)

    # First layer for this row tile: load x into the resident f32 accumulator.
    @pl.when(l == 0)
    def _():
        acc_ref[...] = x_ref[...].astype(jnp.float32)

    x = acc_ref[...]                                        # (tm, D) f32

    # --- MLP up-projection: bf16 MXU, f32 accumulation -----------------------
    h = jnp.dot(x.astype(jnp.bfloat16), w1_ref[0],
                preferred_element_type=jnp.float32)         # (tm, H)
    h = h + b1_ref[0]                                       # (1, H) f32 bcast

    # tanh-approx GELU: tanh goes to the EUP (its own VLIW slot), so it is
    # nearly free next to the MXU/VALU work.  Elementwise tail stays f32
    # (v5e VPU/EUP have no bf16).
    h = 0.5 * h * (1.0 + jnp.tanh(_GELU_C * (h + 0.044715 * h * h * h)))

    # --- MLP down-projection + residual --------------------------------------
    y = jnp.dot(h.astype(jnp.bfloat16), w2_ref[0],
                preferred_element_type=jnp.float32)         # (tm, D)
    y = y + b2_ref[0]                                       # (1, D) f32 bcast

    acc_ref[...] = x + y                                    # stays resident

    # Last layer: write the finished activation back to HBM once.
    @pl.when(l == pl.num_programs(1) - 1)
    def _():
        o_ref[...] = acc_ref[...].astype(o_ref.dtype)


def fused_mlp_chain(x, w1s, b1s, w2s, b2s, *, tm=256):
    """Run the whole block chain in one pallas_call.

    x:   [B, S, D]  (any float dtype; compute is bf16-matmul / f32-tail)
    w1s: [L, D, H]  bf16      b1s: [L, 1, H]  f32
    w2s: [L, H, D]  bf16      b2s: [L, 1, D]  f32
    """
    B, S, D = x.shape
    L, _, H = w1s.shape
    M = B * S
    x2 = x.reshape(M, D)

    # Row tile: as large as possible (MXU utilization, amortize per-step
    # overhead) but never larger than the padded token count; multiple of 8.
    tm = min(tm, pl.cdiv(M, 8) * 8)
    m_pad = pl.cdiv(M, tm) * tm
    if m_pad != M:
        x2 = jnp.pad(x2, ((0, m_pad - M), (0, 0)))

    grid = (m_pad // tm, L)

    cost = pl.CostEstimate(
        flops=4 * m_pad * L * D * H,               # two matmuls per layer
        transcendentals=m_pad * L * H,             # one tanh per hidden elem
        bytes_accessed=(2 * m_pad * D * x.dtype.itemsize
                        + 2 * L * D * H * 2        # bf16 weights
                        + L * (H + D) * 4),        # f32 biases
    )

    out = pl.pallas_call(
        _fused_mlp_chain_kernel,
        out_shape=jax.ShapeDtypeStruct((m_pad, D), x.dtype),
        grid_spec=pltpu.PrefetchScalarGridSpec(
            num_scalar_prefetch=0,
            grid=grid,
            in_specs=[
                # x rows: only consumed at l == 0; block index constant in l.
                pl.BlockSpec((tm, D), lambda i, l: (i, 0)),
                # per-layer weight slabs, streamed (double-buffered) along l.
                pl.BlockSpec((1, D, H), lambda i, l: (l, 0, 0)),
                pl.BlockSpec((1, 1, H), lambda i, l: (l, 0, 0)),
                pl.BlockSpec((1, H, D), lambda i, l: (l, 0, 0)),
                pl.BlockSpec((1, 1, D), lambda i, l: (l, 0, 0)),
            ],
            out_specs=pl.BlockSpec((tm, D), lambda i, l: (i, 0)),
            # Running activation, resident across the layer axis.
            scratch_shapes=[pltpu.VMEM((tm, D), jnp.float32)],
        ),
        compiler_params=pltpu.CompilerParams(
            dimension_semantics=("parallel", "arbitrary"),
            vmem_limit_bytes=48 * 1024 * 1024,
        ),
        cost_estimate=cost,
    )(x2, w1s, b1s, w2s, b2s)

    return out[:M].reshape(B, S, D)


# ----------------------------------------------------------------------------
# Synthetic sub-module: residual MLP block (stands in for a quantized ViT
# block; the bookkeeping args are accepted and ignored, as such blocks do in
# pure inference).  Weights bf16 (MXU-native), biases f32 (VPU-native).
# ----------------------------------------------------------------------------
class MLPBlock:
    def __init__(self, key, dim, hidden):
        k1, k2, k3, k4 = jax.random.split(key, 4)
        self.w1 = (jax.random.normal(k1, (dim, hidden))
                   / jnp.sqrt(dim)).astype(jnp.bfloat16)
        self.b1 = (0.1 * jax.random.normal(k3, (1, hidden))).astype(jnp.float32)
        self.w2 = (jax.random.normal(k2, (hidden, dim))
                   / jnp.sqrt(hidden)).astype(jnp.bfloat16)
        self.b2 = (0.1 * jax.random.normal(k4, (1, dim))).astype(jnp.float32)

    def __call__(self, x, is_index_eval, epoch, iteration, device_id,
                 prefix_token_num):
        w1s, b1s, w2s, b2s = _stack_blocks([self])
        return fused_mlp_chain(x, w1s, b1s, w2s, b2s)


def _stack_blocks(blocks):
    w1s = jnp.stack([b.w1 for b in blocks])   # (L, D, H) bf16
    b1s = jnp.stack([b.b1 for b in blocks])   # (L, 1, H) f32
    w2s = jnp.stack([b.w2 for b in blocks])   # (L, H, D) bf16
    b2s = jnp.stack([b.b2 for b in blocks])   # (L, 1, D) f32
    return w1s, b1s, w2s, b2s


# ----------------------------------------------------------------------------
# CustomSequential — faithful port of the PyTorch container semantics, with a
# fused fast path when every sub-module is an MLPBlock (one pallas_call for
# the whole chain: no per-layer HBM round trips of x).
# ----------------------------------------------------------------------------
class CustomSequential:
    def __init__(self, *modules):
        self.modules_list = list(modules)

    def forward(self, x, is_index_eval, epoch, iteration, device_id,
                prefix_token_num):
        if self.modules_list and all(isinstance(m, MLPBlock)
                                     for m in self.modules_list):
            w1s, b1s, w2s, b2s = _stack_blocks(self.modules_list)
            return fused_mlp_chain(x, w1s, b1s, w2s, b2s)
        # Generic container semantics (identical to the PyTorch loop).
        for module in self.modules_list:
            x = module(x, is_index_eval, epoch, iteration, device_id,
                       prefix_token_num)
        return x

    __call__ = forward


# ----------------------------------------------------------------------------
# Pure-JAX reference (same dtype recipe: bf16 matmuls, f32 accumulation/tail).
# ----------------------------------------------------------------------------
def _ref_block(x, w1, b1, w2, b2):
    h = jnp.dot(x.astype(jnp.bfloat16), w1,
                preferred_element_type=jnp.float32) + b1
    h = 0.5 * h * (1.0 + jnp.tanh(_GELU_C * (h + 0.044715 * h * h * h)))
    y = jnp.dot(h.astype(jnp.bfloat16), w2,
                preferred_element_type=jnp.float32) + b2
    return x + y


def _ref_chain(x, blocks):
    B, S, D = x.shape
    r = x.reshape(B * S, D).astype(jnp.float32)
    for blk in blocks:
        r = _ref_block(r, blk.w1, blk.b1, blk.w2, blk.b2)
    return r.reshape(B, S, D).astype(x.dtype)


if __name__ == "__main__":
    key = jax.random.PRNGKey(0)
    kx, kx2, k1, k2, k3 = jax.random.split(key, 5)

    B, S, D, H = 2, 8, 32, 64                      # batch, seq, hidden, mlp-hidden
    x = jax.random.normal(kx, (B, S, D), dtype=jnp.float32)

    blocks = [MLPBlock(k1, D, H), MLPBlock(k2, D, H), MLPBlock(k3, D, H)]
    model = CustomSequential(*blocks)

    # Bookkeeping args mirror the PyTorch signature; passed through unchanged.
    out = model(x, is_index_eval=True, epoch=0, iteration=0,
                device_id=0, prefix_token_num=1)
    out = jax.block_until_ready(out)

    ref = _ref_chain(x, blocks)
    assert out.shape == (B, S, D)
    assert jnp.allclose(out, ref, atol=1e-2, rtol=1e-2), "mismatch vs reference"

    # Second check: ragged token count (exercises cdiv-grid + row padding,
    # the 197-token ViT case).
    x_odd = jax.random.normal(kx2, (1, 5, D), dtype=jnp.float32)
    out_odd = jax.block_until_ready(
        model(x_odd, is_index_eval=True, epoch=0, iteration=0,
              device_id=0, prefix_token_num=1))
    ref_odd = _ref_chain(x_odd, blocks)
    assert out_odd.shape == (1, 5, D)
    assert jnp.allclose(out_odd, ref_odd, atol=1e-2, rtol=1e-2), \
        "mismatch vs reference (ragged)"

    print("KERNEL_OK")
</pallas_src>

<mosaic_0001>
module attributes {stable_mosaic.version = 11 : i64} {
  func.func @_fused_mlp_chain_kernel(%arg0: i32, %arg1: i32, %arg2: memref<16x32xf32, #tpu.memory_space<vmem>>, %arg3: memref<1x32x64xbf16, #tpu.memory_space<vmem>>, %arg4: memref<1x1x64xf32, #tpu.memory_space<vmem>>, %arg5: memref<1x64x32xbf16, #tpu.memory_space<vmem>>, %arg6: memref<1x1x32xf32, #tpu.memory_space<vmem>>, %arg7: memref<16x32xf32, #tpu.memory_space<vmem>>, %arg8: memref<16x32xf32, #tpu.memory_space<vmem>>) attributes {dimension_semantics = [#tpu.dimension_semantics<parallel>, #tpu.dimension_semantics<arbitrary>], iteration_bounds = array<i64: 1, 3>, scalar_prefetch = 0 : i64, scratch_operands = 1 : i64, tpu.core_type = #tpu.core_type<tc>, window_params = [{transform_indices = @transform_0, window_bounds = array<i64: 16, 32>}, {transform_indices = @transform_1, window_bounds = array<i64: 1, 32, 64>}, {transform_indices = @transform_2, window_bounds = array<i64: 1, 1, 64>}, {transform_indices = @transform_3, window_bounds = array<i64: 1, 64, 32>}, {transform_indices = @transform_4, window_bounds = array<i64: 1, 1, 32>}, {transform_indices = @transform_5, window_bounds = array<i64: 16, 32>}]} {
    %c0_i32 = arith.constant 0 : i32
    %0 = arith.cmpi eq, %arg1, %c0_i32 : i32
    %1 = arith.extui %0 : i1 to i32
    %c0_i32_0 = arith.constant 0 : i32
    %2 = arith.cmpi ne, %1, %c0_i32_0 : i32
    scf.if %2 {
      %c0_22 = arith.constant 0 : index
      %c0_23 = arith.constant 0 : index
      %38 = vector.load %arg2[%c0_22, %c0_23] : memref<16x32xf32, #tpu.memory_space<vmem>>, vector<16x32xf32>
      %c0_24 = arith.constant 0 : index
      %c0_25 = arith.constant 0 : index
      %39 = vector.load %arg8[%c0_24, %c0_25] : memref<16x32xf32, #tpu.memory_space<vmem>>, vector<16x32xf32>
      tpu.vector_store %arg8[%c0_24, %c0_25], %38 {strides = array<i32>} : memref<16x32xf32, #tpu.memory_space<vmem>>, vector<16x32xf32>,
    } else {
    }
    %c0 = arith.constant 0 : index
    %c0_1 = arith.constant 0 : index
    %3 = vector.load %arg8[%c0, %c0_1] : memref<16x32xf32, #tpu.memory_space<vmem>>, vector<16x32xf32>
    %4 = arith.truncf %3 : vector<16x32xf32> to vector<16x32xbf16>
    %c0_2 = arith.constant 0 : index
    %c0_3 = arith.constant 0 : index
    %c0_4 = arith.constant 0 : index
    %5 = vector.load %arg3[%c0_2, %c0_3, %c0_4] : memref<1x32x64xbf16, #tpu.memory_space<vmem>>, vector<1x32x64xbf16>
    %6 = vector.shape_cast %5 : vector<1x32x64xbf16> to vector<32x64xbf16>
    %cst = arith.constant dense<0.000000e+00> : vector<16x64xf32>
    %7 = tpu.matmul %4, %6, %cst {dimension_numbers = #tpu.dot_dimension_numbers<[1], [0], [0], [1], [0, 0, 1, 1], [], []>} : vector<16x32xbf16>, vector<32x64xbf16>, vector<16x64xf32> -> vector<16x64xf32>
    %c0_5 = arith.constant 0 : index
    %c0_6 = arith.constant 0 : index
    %c0_7 = arith.constant 0 : index
    %8 = vector.load %arg4[%c0_5, %c0_6, %c0_7] : memref<1x1x64xf32, #tpu.memory_space<vmem>>, vector<1x1x64xf32>
    %9 = vector.shape_cast %8 : vector<1x1x64xf32> to vector<1x64xf32>
    %10 = vector.broadcast %9 : vector<1x64xf32> to vector<16x64xf32>
    %11 = arith.addf %7, %10 : vector<16x64xf32>
    %cst_8 = arith.constant 5.000000e-01 : f32
    %12 = vector.broadcast %cst_8 : f32 to vector<16x64xf32>
    %13 = arith.mulf %12, %11 : vector<16x64xf32>
    %cst_9 = arith.constant 4.471500e-02 : f32
    %14 = vector.broadcast %cst_9 : f32 to vector<16x64xf32>
    %15 = arith.mulf %14, %11 : vector<16x64xf32>
    %16 = arith.mulf %15, %11 : vector<16x64xf32>
    %17 = arith.mulf %16, %11 : vector<16x64xf32>
    %18 = arith.addf %11, %17 : vector<16x64xf32>
    %cst_10 = arith.constant 0.797884583 : f32
    %19 = vector.broadcast %cst_10 : f32 to vector<16x64xf32>
    %20 = arith.mulf %19, %18 : vector<16x64xf32>
    %21 = math.tanh %20 : vector<16x64xf32>
    %cst_11 = arith.constant 1.000000e+00 : f32
    %22 = vector.broadcast %cst_11 : f32 to vector<16x64xf32>
    %23 = arith.addf %22, %21 : vector<16x64xf32>
    %24 = arith.mulf %13, %23 : vector<16x64xf32>
    %25 = arith.truncf %24 : vector<16x64xf32> to vector<16x64xbf16>
    %c0_12 = arith.constant 0 : index
    %c0_13 = arith.constant 0 : index
    %c0_14 = arith.constant 0 : index
    %26 = vector.load %arg5[%c0_12, %c0_13, %c0_14] : memref<1x64x32xbf16, #tpu.memory_space<vmem>>, vector<1x64x32xbf16>
    %27 = vector.shape_cast %26 : vector<1x64x32xbf16> to vector<64x32xbf16>
    %cst_15 = arith.constant dense<0.000000e+00> : vector<16x32xf32>
    %28 = tpu.matmul %25, %27, %cst_15 {dimension_numbers = #tpu.dot_dimension_numbers<[1], [0], [0], [1], [0, 0, 1, 1], [], []>} : vector<16x64xbf16>, vector<64x32xbf16>, vector<16x32xf32> -> vector<16x32xf32>
    %c0_16 = arith.constant 0 : index
    %c0_17 = arith.constant 0 : index
    %c0_18 = arith.constant 0 : index
    %29 = vector.load %arg6[%c0_16, %c0_17, %c0_18] : memref<1x1x32xf32, #tpu.memory_space<vmem>>, vector<1x1x32xf32>
    %30 = vector.shape_cast %29 : vector<1x1x32xf32> to vector<1x32xf32>
    %31 = vector.broadcast %30 : vector<1x32xf32> to vector<16x32xf32>
    %32 = arith.addf %28, %31 : vector<16x32xf32>
    %33 = arith.addf %3, %32 : vector<16x32xf32>
    %c0_19 = arith.constant 0 : index
    %c0_20 = arith.constant 0 : index
    %34 = vector.load %arg8[%c0_19, %c0_20] : memref<16x32xf32, #tpu.memory_space<vmem>>, vector<16x32xf32>
    tpu.vector_store %arg8[%c0_19, %c0_20], %33 {strides = array<i32>} : memref<16x32xf32, #tpu.memory_space<vmem>>, vector<16x32xf32>,
    %c2_i32 = arith.constant 2 : i32
    %35 = arith.cmpi eq, %arg1, %c2_i32 : i32
    %36 = arith.extui %35 : i1 to i32
    %c0_i32_21 = arith.constant 0 : i32
    %37 = arith.cmpi ne, %36, %c0_i32_21 : i32
    scf.if %37 {
      %c0_22 = arith.constant 0 : index
      %c0_23 = arith.constant 0 : index
      %38 = vector.load %arg8[%c0_22, %c0_23] : memref<16x32xf32, #tpu.memory_space<vmem>>, vector<16x32xf32>
      %c0_24 = arith.constant 0 : index
      %c0_25 = arith.constant 0 : index
      %39 = vector.load %arg7[%c0_24, %c0_25] : memref<16x32xf32, #tpu.memory_space<vmem>>, vector<16x32xf32>
      tpu.vector_store %arg7[%c0_24, %c0_25], %38 {strides = array<i32>} : memref<16x32xf32, #tpu.memory_space<vmem>>, vector<16x32xf32>,
    } else {
    }
    return
  }
  func.func @transform_0(%arg0: i32, %arg1: i32) -> (i32, i32) {
    %c0_i32 = arith.constant 0 : i32
    %c0_i32_0 = arith.constant 0 : i32
    return %arg0, %c0_i32 : i32, i32
  }
  func.func @transform_1(%arg0: i32, %arg1: i32) -> (i32, i32, i32) {
    %c0_i32 = arith.constant 0 : i32
    %c0_i32_0 = arith.constant 0 : i32
    %c0_i32_1 = arith.constant 0 : i32
    return %arg1, %c0_i32, %c0_i32_0 : i32, i32, i32
  }
  func.func @transform_2(%arg0: i32, %arg1: i32) -> (i32, i32, i32) {
    %c0_i32 = arith.constant 0 : i32
    %c0_i32_0 = arith.constant 0 : i32
    %c0_i32_1 = arith.constant 0 : i32
    return %arg1, %c0_i32, %c0_i32_0 : i32, i32, i32
  }
  func.func @transform_3(%arg0: i32, %arg1: i32) -> (i32, i32, i32) {
    %c0_i32 = arith.constant 0 : i32
    %c0_i32_0 = arith.constant 0 : i32
    %c0_i32_1 = arith.constant 0 : i32
    return %arg1, %c0_i32, %c0_i32_0 : i32, i32, i32
  }
  func.func @transform_4(%arg0: i32, %arg1: i32) -> (i32, i32, i32) {
    %c0_i32 = arith.constant 0 : i32
    %c0_i32_0 = arith.constant 0 : i32
    %c0_i32_1 = arith.constant 0 : i32
    return %arg1, %c0_i32, %c0_i32_0 : i32, i32, i32
  }
  func.func @transform_5(%arg0: i32, %arg1: i32) -> (i32, i32) {
    %c0_i32 = arith.constant 0 : i32
    %c0_i32_0 = arith.constant 0 : i32
    return %arg0, %c0_i32 : i32, i32
  }
}

</mosaic_0001>

<llo_original>
// kernel: tpu_custom_call.1
$region0: #{tpu_custom_call.1}
  #allocation0 [shape = 'u32[]', space=smem, size = 0x4, offset = 0x4, fixed_abs, tag = 'smem constant byte address 0x4 - core index']
  #allocation1 [shape = 'u32[144,128]{1,0:T(1,128)}', space=vmem, size = 0x12000, scoped, tag = 'internal scratch']
  #allocation2 [shape = 'f32[16,32]{1,0:T(8,128)}', space=vmem, size = 0x2000, scoped, tag = 'scratch operand']
  %s0 = inlined_call_operand.vmem [shape: f32[16,32], index: 0, kind: input, shape index: {}]
  %s1 = inlined_call_operand.vmem [shape: bf16[3,32,64], index: 1, kind: input, shape index: {}]
  %s2 = inlined_call_operand.vmem [shape: f32[3,1,64], index: 2, kind: input, shape index: {}]
  %s3 = inlined_call_operand.vmem [shape: bf16[3,64,32], index: 3, kind: input, shape index: {}]
  %s4 = inlined_call_operand.vmem [shape: f32[3,1,32], index: 4, kind: input, shape index: {}]
  %s5 = inlined_call_operand.hbm [shape: f32[16,32], index: 5, kind: output, shape index: {}]
  %s6 = sld [smem:[#allocation0]]
  $region61: #{tpu_custom_call.1} parent=0
    _
  %s8 = ssub.s32 1, %s6
  %s9 = scalar_select 0, %s8, %s6
  $region1: #{tpu_custom_call.1} parent=0
    #allocation3 [shape = 'u8[8192]{0}', space=vmem, size = 0x2000, scoped, tag = 'output window, operand 0, single buffered']
    #allocation4 [shape = 's32[2]{0}', space=sflag, size = 0x8, scoped, tag = 'scoped memory for tpu_custom_call.1']
    %10 = vsyncpa [#allocation4], 0
    loop: start=0, step=1, limit=5
    $region2: #{tpu_custom_call.1} parent=1 // loop_pre_header
      _
    $region3: #{tpu_custom_call.1} parent=1 // loop_header
      %s12 = sphi 0, %s16
      %p13 = scmp.ge.s32.totalorder %s12, 5
      %s19 = sphi 0, %s31
      %s20 = sphi 0, %s27
      %s21 = sphi 0, %s19
      %s22 = sphi 0, %s20
      %s23 = sphi 0, %s21
      %s24 = sphi 0, %s22
      %s34 = sphi 0, %s36
      %s37 = sphi 0, %s34
      %s38 = sphi 0, %s37
      %s54 = sphi 0, %s38
      %s60 = sphi 0, %s62
      %s63 = sphi 0, %s60
      %s64 = sphi 0, %s63
      %s80 = sphi 0, %s64
      %s86 = sphi 0, %s88
      %s89 = sphi 0, %s86
      %s90 = sphi 0, %s89
      %s106 = sphi 0, %s90
      %s112 = sphi 0, %s114
      %s115 = sphi 0, %s112
      %s116 = sphi 0, %s115
      %s132 = sphi 0, %s116
      %s138 = sphi 0, %s140
      %s141 = sphi 0, %s138
      %s142 = sphi 0, %s141
      %s158 = sphi 0, %s142
      %s164 = sphi 0, %s166
      %s167 = sphi 0, %s164
      %s168 = sphi 0, %s167
      %s184 = sphi 0, %s168
    $region4: #{tpu_custom_call.1} parent=1 // loop_header_branch
      %15 = sbr.rel (%p13) target = $region8
    $region5: #{tpu_custom_call.1} parent=1 // loop_body
      %s17 = ssub.s32 %s12, 1
      %s18 = ssub.s32 %s12, 2
      %s25 = sadd.s32 1, %s20
      %p26 = scmp.ge.s32.totalorder %s25, 3
      %s27 = scalar_select %p26, 0, %s25
      %s28 = sadd.s32 1, %s19
      %s29 = scalar_select %p26, %s28, %s19
      %p30 = scmp.ge.s32.totalorder %s29, 1
      %s31 = scalar_select %p30, 0, %s29
      %s32 = ssub.s32 %s19, %s31
      %p33 = scmp.eq.s32.totalorder %s32, 0
      %s35 = sadd.s32 %s34, 1
      %s36 = scalar_select %p33, %s34, %s35
      %p39 = pneg %p33
      %p40 = scmp.eq.s32.totalorder %s12, 2
      %p41 = por %p39, %p40
      %p42 = scmp.ne.s32.totalorder %s34, %s37
      %p43 = scmp.eq.s32.totalorder %s12, 0
      %p44 = por %p42, %p43
      %p45 = scmp.ne.s32.totalorder %s34, %s37
      %p46 = scmp.eq.s32.totalorder %s17, 2
      %p47 = por %p45, %p46
      %p48 = scmp.ne.s32.totalorder %s37, %s38
      %p49 = scmp.eq.s32.totalorder %s17, 0
      %p50 = por %p48, %p49
      %p51 = scmp.ne.s32.totalorder %s37, %s38
      %p52 = scmp.eq.s32.totalorder %s18, 2
      %p53 = por %p51, %p52
      %p55 = scmp.ne.s32.totalorder %s38, %s54
      %p56 = scmp.eq.s32.totalorder %s18, 0
      %p57 = por %p55, %p56
      %s58 = ssub.s32 %s20, %s27
      %p59 = scmp.eq.s32.totalorder %s58, 0
      %s61 = sadd.s32 %s60, 1
      %s62 = scalar_select %p59, %s60, %s61
      %p65 = pneg %p59
      %p66 = scmp.eq.s32.totalorder %s12, 2
      %p67 = por %p65, %p66
      %p68 = scmp.ne.s32.totalorder %s60, %s63
      %p69 = scmp.eq.s32.totalorder %s12, 0
      %p70 = por %p68, %p69
      %p71 = scmp.ne.s32.totalorder %s60, %s63
      %p72 = scmp.eq.s32.totalorder %s17, 2
      %p73 = por %p71, %p72
      %p74 = scmp.ne.s32.totalorder %s63, %s64
      %p75 = scmp.eq.s32.totalorder %s17, 0
      %p76 = por %p74, %p75
      %p77 = scmp.ne.s32.totalorder %s63, %s64
      %p78 = scmp.eq.s32.totalorder %s18, 2
      %p79 = por %p77, %p78
      %p81 = scmp.ne.s32.totalorder %s64, %s80
      %p82 = scmp.eq.s32.totalorder %s18, 0
      %p83 = por %p81, %p82
      %s84 = ssub.s32 %s20, %s27
      %p85 = scmp.eq.s32.totalorder %s84, 0
      %s87 = sadd.s32 %s86, 1
      %s88 = scalar_select %p85, %s86, %s87
      %p91 = pneg %p85
      %p92 = scmp.eq.s32.totalorder %s12, 2
      %p93 = por %p91, %p92
      %p94 = scmp.ne.s32.totalorder %s86, %s89
      %p95 = scmp.eq.s32.totalorder %s12, 0
      %p96 = por %p94, %p95
      %p97 = scmp.ne.s32.totalorder %s86, %s89
      %p98 = scmp.eq.s32.totalorder %s17, 2
      %p99 = por %p97, %p98
      %p100 = scmp.ne.s32.totalorder %s89, %s90
      %p101 = scmp.eq.s32.totalorder %s17, 0
      %p102 = por %p100, %p101
      %p103 = scmp.ne.s32.totalorder %s89, %s90
      %p104 = scmp.eq.s32.totalorder %s18, 2
      %p105 = por %p103, %p104
      %p107 = scmp.ne.s32.totalorder %s90, %s106
      %p108 = scmp.eq.s32.totalorder %s18, 0
      %p109 = por %p107, %p108
      %s110 = ssub.s32 %s20, %s27
      %p111 = scmp.eq.s32.totalorder %s110, 0
      %s113 = sadd.s32 %s112, 1
      %s114 = scalar_select %p111, %s112, %s113
      %p117 = pneg %p111
      %p118 = scmp.eq.s32.totalorder %s12, 2
      %p119 = por %p117, %p118
      %p120 = scmp.ne.s32.totalorder %s112, %s115
      %p121 = scmp.eq.s32.totalorder %s12, 0
      %p122 = por %p120, %p121
      %p123 = scmp.ne.s32.totalorder %s112, %s115
      %p124 = scmp.eq.s32.totalorder %s17, 2
      %p125 = por %p123, %p124
      %p126 = scmp.ne.s32.totalorder %s115, %s116
      %p127 = scmp.eq.s32.totalorder %s17, 0
      %p128 = por %p126, %p127
      %p129 = scmp.ne.s32.totalorder %s115, %s116
      %p130 = scmp.eq.s32.totalorder %s18, 2
      %p131 = por %p129, %p130
      %p133 = scmp.ne.s32.totalorder %s116, %s132
      %p134 = scmp.eq.s32.totalorder %s18, 0
      %p135 = por %p133, %p134
      %s136 = ssub.s32 %s20, %s27
      %p137 = scmp.eq.s32.totalorder %s136, 0
      %s139 = sadd.s32 %s138, 1
      %s140 = scalar_select %p137, %s138, %s139
      %p143 = pneg %p137
      %p144 = scmp.eq.s32.totalorder %s12, 2
      %p145 = por %p143, %p144
      %p146 = scmp.ne.s32.totalorder %s138, %s141
      %p147 = scmp.eq.s32.totalorder %s12, 0
      %p148 = por %p146, %p147
      %p149 = scmp.ne.s32.totalorder %s138, %s141
      %p150 = scmp.eq.s32.totalorder %s17, 2
      %p151 = por %p149, %p150
      %p152 = scmp.ne.s32.totalorder %s141, %s142
      %p153 = scmp.eq.s32.totalorder %s17, 0
      %p154 = por %p152, %p153
      %p155 = scmp.ne.s32.totalorder %s141, %s142
      %p156 = scmp.eq.s32.totalorder %s18, 2
      %p157 = por %p155, %p156
      %p159 = scmp.ne.s32.totalorder %s142, %s158
      %p160 = scmp.eq.s32.totalorder %s18, 0
      %p161 = por %p159, %p160
      %s162 = ssub.s32 %s19, %s31
      %p163 = scmp.eq.s32.totalorder %s162, 0
      %s165 = sadd.s32 %s164, 1
      %s166 = scalar_select %p163, %s164, %s165
      %p169 = pneg %p163
      %p170 = scmp.eq.s32.totalorder %s12, 2
      %p171 = por %p169, %p170
      %p172 = scmp.ne.s32.totalorder %s164, %s167
      %p173 = scmp.eq.s32.totalorder %s12, 0
      %p174 = por %p172, %p173
      %p175 = scmp.ne.s32.totalorder %s164, %s167
      %p176 = scmp.eq.s32.totalorder %s17, 2
      %p177 = por %p175, %p176
      %p178 = scmp.ne.s32.totalorder %s167, %s168
      %p179 = scmp.eq.s32.totalorder %s17, 0
      %p180 = por %p178, %p179
      %p181 = scmp.ne.s32.totalorder %s167, %s168
      %p182 = scmp.eq.s32.totalorder %s18, 2
      %p183 = por %p181, %p182
      %p185 = scmp.ne.s32.totalorder %s168, %s184
      %p186 = scmp.eq.s32.totalorder %s18, 0
      %p187 = por %p185, %p186
      %p188 = scmp.le.s32.totalorder 1, %s12
      %p189 = scmp.lt.s32.totalorder %s12, 4
      %p190 = pnand %p188, %p189
      %p191 = pneg %p190
      // Predicated region
      $region9: #{tpu_custom_call.1} parent=5 // pred_check
        _
      $region10: #{tpu_custom_call.1} parent=5 // pred_check_branch
        %193 = sbr.rel (%p190) target = $region12
      $region11: #{tpu_custom_call.1} parent=5 // pred_region
        %s194 = ssub.s32 %s12, 1
        // Predicated region
        $region13: #{tpu_custom_call.1} parent=11 // pred_check
          %p195 = pneg %p50
        $region14: #{tpu_custom_call.1} parent=11 // pred_check_branch
          %197 = sbr.rel (%p195) target = $region16
        $region15: #{tpu_custom_call.1} parent=11 // pred_region
          %s198 = smul.u32 2, %s21
          %p199 = scmp.lt.s32.totalorder %s198, 1
          %s200 = scalar_select %p199, %s198, 1
          %s201 = smul.addr %s200, 8
          %s202 = scalar_lea.vmem %s0, %s201
          %s203 = smul.u32 2, %s21
        $region16: #{tpu_custom_call.1} parent=11 // pred_fallthru
          _
      $region12: #{tpu_custom_call.1} parent=5 // pred_fallthru
        _
      %p204 = scmp.lt.s32.totalorder %s12, 3
      // Predicated region
      $region17: #{tpu_custom_call.1} parent=5 // pred_check
        %p205 = pneg %p204
      $region18: #{tpu_custom_call.1} parent=5 // pred_check_branch
        %207 = sbr.rel (%p205) target = $region20
      $region19: #{tpu_custom_call.1} parent=5 // pred_region
        // Predicated region
        $region21: #{tpu_custom_call.1} parent=19 // pred_check
          %p208 = pneg %p70
        $region22: #{tpu_custom_call.1} parent=19 // pred_check_branch
          %210 = sbr.rel (%p208) target = $region24
        $region23: #{tpu_custom_call.1} parent=19 // pred_region
          %p211 = scmp.lt.s32.totalorder %s20, 2
          %s212 = scalar_select %p211, %s20, 2
          %s213 = smul.addr %s212, 4
          %s214 = smul.addr %s213, 4
          %s215 = scalar_lea.vmem %s1, %s214
        $region24: #{tpu_custom_call.1} parent=19 // pred_fallthru
          _
        // Predicated region
        $region25: #{tpu_custom_call.1} parent=19 // pred_check
          %p216 = pneg %p96
        $region26: #{tpu_custom_call.1} parent=19 // pred_check_branch
          %218 = sbr.rel (%p216) target = $region28
        $region27: #{tpu_custom_call.1} parent=19 // pred_region
          %p219 = scmp.lt.s32.totalorder %s20, 2
          %s220 = scalar_select %p219, %s20, 2
          %s221 = scalar_lea.vmem %s2, %s220
        $region28: #{tpu_custom_call.1} parent=19 // pred_fallthru
          _
        // Predicated region
        $region29: #{tpu_custom_call.1} parent=19 // pred_check
          %p222 = pneg %p122
        $region30: #{tpu_custom_call.1} parent=19 // pred_check_branch
          %224 = sbr.rel (%p222) target = $region32
        $region31: #{tpu_custom_call.1} parent=19 // pred_region
          %p225 = scmp.lt.s32.totalorder %s20, 2
          %s226 = scalar_select %p225, %s20, 2
          %s227 = smul.addr %s226, 8
          %s228 = smul.addr %s227, 4
          %s229 = scalar_lea.vmem %s3, %s228
        $region32: #{tpu_custom_call.1} parent=19 // pred_fallthru
          _
        // Predicated region
        $region33: #{tpu_custom_call.1} parent=19 // pred_check
          %p230 = pneg %p148
        $region34: #{tpu_custom_call.1} parent=19 // pred_check_branch
          %232 = sbr.rel (%p230) target = $region36
        $region35: #{tpu_custom_call.1} parent=19 // pred_region
          %p233 = scmp.lt.s32.totalorder %s20, 2
          %s234 = scalar_select %p233, %s20, 2
          %s235 = scalar_lea.vmem %s4, %s234
        $region36: #{tpu_custom_call.1} parent=19 // pred_fallthru
          _
      $region20: #{tpu_custom_call.1} parent=5 // pred_fallthru
        _
      %p236 = scmp.le.s32.totalorder 1, %s12
      %p237 = scmp.lt.s32.totalorder %s12, 4
      %p238 = pnand %p236, %p237
      %p239 = pneg %p238
      // Predicated region
      $region37: #{tpu_custom_call.1} parent=5 // pred_check
        _
      $region38: #{tpu_custom_call.1} parent=5 // pred_check_branch
        %241 = sbr.rel (%p238) target = $region40
      $region39: #{tpu_custom_call.1} parent=5 // pred_region
        %s242 = ssub.s32 %s12, 1
        %s243 = smul.u32 2, %s21
        %p244 = scmp.lt.s32.totalorder %s243, 1
        %s245 = scalar_select %p244, %s243, 1
        %s246 = smul.addr %s245, 8
        %s247 = scalar_lea.vmem %s0, %s246
        %p248 = pneg %p50
        %p249 = pneg %p47
        %p250 = scmp.lt.s32.totalorder %s22, 2
        %s251 = scalar_select %p250, %s22, 2
        %s252 = smul.addr %s251, 4
        %s253 = smul.addr %s252, 4
        %s254 = scalar_lea.vmem %s1, %s253
        %p255 = pneg %p76
        %p256 = pneg %p73
        %p257 = scmp.lt.s32.totalorder %s22, 2
        %s258 = scalar_select %p257, %s22, 2
        %s259 = scalar_lea.vmem %s2, %s258
        %p260 = pneg %p102
        %p261 = pneg %p99
        %p262 = scmp.lt.s32.totalorder %s22, 2
        %s263 = scalar_select %p262, %s22, 2
        %s264 = smul.addr %s263, 8
        %s265 = smul.addr %s264, 4
        %s266 = scalar_lea.vmem %s3, %s265
        %p267 = pneg %p128
        %p268 = pneg %p125
        %p269 = scmp.lt.s32.totalorder %s22, 2
        %s270 = scalar_select %p269, %s22, 2
        %s271 = scalar_lea.vmem %s4, %s270
        %p272 = pneg %p154
        %p273 = pneg %p151
        %p274 = pneg %p180
        %p275 = pneg %p177
        %s276 = smul.u32 2, %s21
        %p277 = scmp.lt.s32.totalorder %s276, 1
        %s278 = scalar_select %p277, %s276, 1
        %s279 = smul.addr %s278, 8
        %s280 = scalar_lea.vmem %s0, %s279
        %s281 = smul.u32 2, %s21
        %p282 = scmp.lt.s32.totalorder %s22, 2
        %s283 = scalar_select %p282, %s22, 2
        %s284 = smul.addr %s283, 4
        %s285 = smul.addr %s284, 4
        %s286 = scalar_lea.vmem %s1, %s285
        %p287 = scmp.lt.s32.totalorder %s22, 2
        %s288 = scalar_select %p287, %s22, 2
        %s289 = scalar_lea.vmem %s2, %s288
        %p290 = scmp.lt.s32.totalorder %s22, 2
        %s291 = scalar_select %p290, %s22, 2
        %s292 = smul.addr %s291, 8
        %s293 = smul.addr %s292, 4
        %s294 = scalar_lea.vmem %s3, %s293
        %p295 = scmp.lt.s32.totalorder %s22, 2
        %s296 = scalar_select %p295, %s22, 2
        %s297 = scalar_lea.vmem %s4, %s296
        %s298 = smul.u32 2, %s21
        %p300 = scmp.eq.s32.totalorder %s22, 0
        // Predicated region
        $region41: #{tpu_custom_call.1} parent=39 // pred_check
          %p301 = pneg %p300
        $region42: #{tpu_custom_call.1} parent=39 // pred_check_branch
          %303 = sbr.rel (%p301) target = $region44
        $region43: #{tpu_custom_call.1} parent=39 // pred_region
          %v304 = vld [vmem:[%s280] sm:$0xff]
          %v305 = vld [vmem:[%s280 + $0x8] sm:$0xff]
          %vm306 = vcmask 261120
          %307 = vst.msk [vmem:[#allocation2] sm:$0xff] %vm306, %v304
          %308 = vst.msk [vmem:[#allocation2 + $0x8] sm:$0xff] %vm306, %v305
        $region44: #{tpu_custom_call.1} parent=39 // pred_fallthru
          _
        %v309 = vld [vmem:[#allocation2] sm:$0xff]
        %v310 = vld [vmem:[#allocation2 + $0x8] sm:$0xff]
        %v311 = vpack.c.bf16 %v310, %v309
        %v312 = vld [vmem:[%s286] sm:$0xf]
        %v313 = vld [vmem:[%s286 + $0x4] sm:$0xf]
        %v314 = vld [vmem:[%s286 + $0x8] sm:$0xf]
        %v315 = vld [vmem:[%s286 + $0xc] sm:$0xf]
        %v316 = vld [vmem:[%s289] sm:$0x1]
        %v318 = vlaneseq
        %v319 = vshrl.u32 %v318, 7
        %v320 = vsub.s32 0, %v319
        %v321 = vrot.slane %v316, %v320
        %v327 = vunpack.c.l.b16 %v312
        %v328 = vunpack.c.l.b16 %v313
        %v329 = vunpack.c.l.b16 %v314
        %v330 = vunpack.c.l.b16 %v315
        %v331 = vpack.c.b16 %v328, %v327
        %v332 = vpack.c.b16 %v330, %v329
        %vm335 = vcmask 261120
        %v337 = vsel %vm335, %v311, 0
        %339 = vmatprep.subr.bf16.mxu0 0
        %340 = vmatpush1.bf16.msra.mxu0 %v331
        %341 = vmatprep.subr.bf16.mxu0 0
        %342 = vmatpush1.bf16.msra.mxu0 %v332
        %343 = vmatprep.subr.bf16.mxu0 0
        %344 = vmatpush1.bf16.msra.mxu0 0
        %345 = vmatprep.subr.bf16.mxu0 0
        %346 = vmatpush1.bf16.msra.mxu0 0
        %347 = vmatprep.subr.bf16.mxu0 0
        %348 = vmatpush1.bf16.msra.mxu0 0
        %349 = vmatprep.subr.bf16.mxu0 0
        %350 = vmatpush1.bf16.msra.mxu0 0
        %351 = vmatprep.subr.bf16.mxu0 0
        %352 = vmatpush1.bf16.msra.mxu0 0
        %353 = vmatprep.subr.bf16.mxu0 0
        %354 = vmatpush1.bf16.msra.mxu0 0
        %355 = vmatprep.subr.bf16.mxu0 0
        %356 = vmatpush1.bf16.msra.mxu0 0
        %357 = vmatprep.subr.bf16.mxu0 0
        %358 = vmatpush1.bf16.msra.mxu0 0
        %359 = vmatprep.subr.bf16.mxu0 0
        %360 = vmatpush1.bf16.msra.mxu0 0
        %361 = vmatprep.subr.bf16.mxu0 0
        %362 = vmatpush1.bf16.msra.mxu0 0
        %363 = vmatprep.subr.bf16.mxu0 0
        %364 = vmatpush1.bf16.msra.mxu0 0
        %365 = vmatprep.subr.bf16.mxu0 0
        %366 = vmatpush1.bf16.msra.mxu0 0
        %367 = vmatprep.subr.bf16.mxu0 0
        %368 = vmatpush1.bf16.msra.mxu0 0
        %369 = vmatprep.subr.bf16.mxu0 0
        %370 = vmatpush1.bf16.msra.mxu0 0
        %371 = vmatprep.mubr.bf16.mxu0 0
        %372 = vmatmul.mubr.bf16.gmra.mrb[0].mxu0 %v337
        %v373 = vpop.f32.mrb[0].mxu0
        %v374 = vadd.f32 %v321, %v373
        %v375 = vpop.f32.mrb[0].mxu0
        %v376 = vpop.f32.mrb[0].mxu0
        %v377 = vadd.f32 %v321, %v376
        %v378 = vpop.f32.mrb[0].mxu0
        %379 = vdwg.mxu0
        %v380 = vmul.f32 %v374, 0.5
        %v381 = vmul.f32 %v377, 0.5
        %v382 = vmul.f32 %v374, 0.044715
        %v383 = vmul.f32 %v377, 0.044715
        %v384 = vmul.f32 %v382, %v374
        %v385 = vmul.f32 %v383, %v377
        %v386 = vmul.f32 %v384, %v374
        %v387 = vmul.f32 %v385, %v377
        %v388 = vadd.f32 %v374, %v386
        %v389 = vadd.f32 %v377, %v387
        %v390 = vmul.f32 %v388, 0.7978846
        %v391 = vmul.f32 %v389, 0.7978846
        %v392 = vtanh.pop %v390
        %v393 = vtanh.pop %v391
        %v394 = vadd.f32 %v392, 1.0
        %v395 = vadd.f32 %v393, 1.0
        %v396 = vmul.f32 %v380, %v394
        %v397 = vmul.f32 %v381, %v395
        %v398 = vpack.c.bf16 %v397, %v396
        %v399 = vld [vmem:[%s294] sm:$0xf]
        %v400 = vld [vmem:[%s294 + $0x4] sm:$0xf]
        %v401 = vld [vmem:[%s294 + $0x8] sm:$0xf]
        %v402 = vld [vmem:[%s294 + $0xc] sm:$0xf]
        %v403 = vld [vmem:[%s294 + $0x10] sm:$0xf]
        %v404 = vld [vmem:[%s294 + $0x14] sm:$0xf]
        %v405 = vld [vmem:[%s294 + $0x18] sm:$0xf]
        %v406 = vld [vmem:[%s294 + $0x1c] sm:$0xf]
        %v407 = vld [vmem:[%s297] sm:$0x1]
        %v409 = vlaneseq
        %v410 = vshrl.u32 %v409, 7
        %v411 = vsub.s32 0, %v410
        %v412 = vrot.slane %v407, %v411
        %v422 = vunpack.c.l.b16 %v399
        %v423 = vunpack.c.l.b16 %v400
        %v424 = vunpack.c.l.b16 %v401
        %v425 = vunpack.c.l.b16 %v402
        %v426 = vunpack.c.l.b16 %v403
        %v427 = vunpack.c.l.b16 %v404
        %v428 = vunpack.c.l.b16 %v405
        %v429 = vunpack.c.l.b16 %v406
        %v430 = vpack.c.b16 %v423, %v422
        %v431 = vpack.c.b16 %v425, %v424
        %v432 = vpack.c.b16 %v427, %v426
        %v433 = vpack.c.b16 %v429, %v428
        %vm438 = vcmask 523264
        %v440 = vsel %vm438, %v398, 0
        %442 = vmatprep.subr.bf16.mxu0 0
        %443 = vmatpush1.bf16.msra.mxu0 %v430
        %444 = vmatprep.subr.bf16.mxu0 0
        %445 = vmatpush1.bf16.msra.mxu0 %v431
        %446 = vmatprep.subr.bf16.mxu0 0
        %447 = vmatpush1.bf16.msra.mxu0 %v432
        %448 = vmatprep.subr.bf16.mxu0 0
        %449 = vmatpush1.bf16.msra.mxu0 %v433
        %450 = vmatprep.subr.bf16.mxu0 0
        %451 = vmatpush1.bf16.msra.mxu0 0
        %452 = vmatprep.subr.bf16.mxu0 0
        %453 = vmatpush1.bf16.msra.mxu0 0
        %454 = vmatprep.subr.bf16.mxu0 0
        %455 = vmatpush1.bf16.msra.mxu0 0
        %456 = vmatprep.subr.bf16.mxu0 0
        %457 = vmatpush1.bf16.msra.mxu0 0
        %458 = vmatprep.subr.bf16.mxu0 0
        %459 = vmatpush1.bf16.msra.mxu0 0
        %460 = vmatprep.subr.bf16.mxu0 0
        %461 = vmatpush1.bf16.msra.mxu0 0
        %462 = vmatprep.subr.bf16.mxu0 0
        %463 = vmatpush1.bf16.msra.mxu0 0
        %464 = vmatprep.subr.bf16.mxu0 0
        %465 = vmatpush1.bf16.msra.mxu0 0
        %466 = vmatprep.subr.bf16.mxu0 0
        %467 = vmatpush1.bf16.msra.mxu0 0
        %468 = vmatprep.subr.bf16.mxu0 0
        %469 = vmatpush1.bf16.msra.mxu0 0
        %470 = vmatprep.subr.bf16.mxu0 0
        %471 = vmatpush1.bf16.msra.mxu0 0
        %472 = vmatprep.subr.bf16.mxu0 0
        %473 = vmatpush1.bf16.msra.mxu0 0
        %474 = vmatprep.mubr.bf16.mxu0 0
        %475 = vmatmul.mubr.bf16.gmra.mrb[0].mxu0 %v440
        %v476 = vpop.f32.mrb[0].mxu0
        %v477 = vadd.f32 %v412, %v476
        %v478 = vpop.f32.mrb[0].mxu0
        %v479 = vpop.f32.mrb[0].mxu0
        %v480 = vadd.f32 %v412, %v479
        %v481 = vpop.f32.mrb[0].mxu0
        %482 = vdwg.mxu0
        %v483 = vadd.f32 %v309, %v477
        %v484 = vadd.f32 %v310, %v480
        %485 = vst.msk [vmem:[#allocation2] sm:$0xff] %vm335, %v483
        %486 = vst.msk [vmem:[#allocation2 + $0x8] sm:$0xff] %vm335, %v484
        %p487 = scmp.eq.s32.totalorder %s22, 2
        // Predicated region
        $region45: #{tpu_custom_call.1} parent=39 // pred_check
          %p488 = pneg %p487
        $region46: #{tpu_custom_call.1} parent=39 // pred_check_branch
          %490 = sbr.rel (%p488) target = $region48
        $region47: #{tpu_custom_call.1} parent=39 // pred_region
          %v491 = vld [vmem:[#allocation2] sm:$0xff]
          %v492 = vld [vmem:[#allocation2 + $0x8] sm:$0xff]
          %493 = vst.msk [vmem:[#allocation3] sm:$0xff] %vm335, %v491
          %494 = vst.msk [vmem:[#allocation3 + $0x8] sm:$0xff] %vm335, %v492
        $region48: #{tpu_custom_call.1} parent=39 // pred_fallthru
          _
        // Predicated region
        $region49: #{tpu_custom_call.1} parent=39 // pred_check
          %p495 = pneg %p177
        $region50: #{tpu_custom_call.1} parent=39 // pred_check_branch
          %497 = sbr.rel (%p495) target = $region52
        $region51: #{tpu_custom_call.1} parent=39 // pred_region
          %s498 = smul.u32 2, %s21
          %s500 = ssub.s32 256, 256
          %501 = vsyncadd [#allocation4], %s500
          %s502 = smul.addr %s498, 128
          %s503 = scalar_lea.hbm %s5, %s502
          %s504 = sshll.u32 [#allocation3], 4
          %s505 = int_to_ptr.vmem [resolvable:$true] %s504
          %510 = dma.vmem_to_hbm [thread:$0]  %s505, 256, %s503, [#allocation4], 128, 128, 8
        $region52: #{tpu_custom_call.1} parent=39 // pred_fallthru
          _
        // Predicated region
        $region53: #{tpu_custom_call.1} parent=39 // pred_check
          %p511 = pneg %p177
        $region54: #{tpu_custom_call.1} parent=39 // pred_check_branch
          %513 = sbr.rel (%p511) target = $region56
        $region55: #{tpu_custom_call.1} parent=39 // pred_region
          %514 = dma.done [#allocation4], 256
        $region56: #{tpu_custom_call.1} parent=39 // pred_fallthru
          _
      $region40: #{tpu_custom_call.1} parent=5 // pred_fallthru
        _
      %p515 = scmp.le.s32.totalorder 2, %s12
      // Predicated region
      $region57: #{tpu_custom_call.1} parent=5 // pred_check
        %p516 = pneg %p515
      $region58: #{tpu_custom_call.1} parent=5 // pred_check_branch
        %518 = sbr.rel (%p516) target = $region60
      $region59: #{tpu_custom_call.1} parent=5 // pred_region
        %s519 = ssub.s32 %s12, 2
      $region60: #{tpu_custom_call.1} parent=5 // pred_fallthru
        _
    $region6: #{tpu_custom_call.1} parent=1 // loop_footer
      %s16 = sadd.s32 1, %s12
    $region7: #{tpu_custom_call.1} parent=1 // loop_footer_branch
      %11 = sbr.rel target = $region3
    $region8: #{tpu_custom_call.1} parent=1 // loop_exit
      _
    %520 = vsyncpa [#allocation4], 1
    %s521 = scalar_lea.sflag [#allocation4], 1
    %522 = vsyncpa %s521, 1

</llo_original>
